<compile_context>
chip_gen: v7x
topology: tpu7x:2x2x1
jax: 0.10.0
libtpu: 0.0.40
codegen_flags: <defaults>
</compile_context>

<pallas_src>
import jax
import jax.numpy as jnp
from jax.experimental import pallas as pl
from jax.experimental.pallas import tpu as pltpu


def _round_up(v, m):
    return ((v + m - 1) // m) * m


# ----------------------------------------------------------------------------
# Fused MLP kernel: (x, w1, b1, w2, b2, ..., wn, bn) -> logits
# ----------------------------------------------------------------------------
def _mlp_kernel(x_ref, *refs):
    # x_ref : (TM, E) f32 activation tile (downcast to bf16 in-kernel)
    # refs  : (w1, b1, ..., wn, bn, o_ref)
    #         wi : (Din_i, Dout_i) bf16 (MXU operands, lane-padded Dout)
    #         bi : (1, Dout_i)     f32  (bias add stays f32 on the VPU)
    # o_ref : (TM, C_pad)          f32  (lane-dense slab, C_pad % 128 == 0)
    o_ref = refs[-1]
    wb = refs[:-1]
    n_layers = len(wb) // 2

    # In-kernel downcast: x is read from HBM once as f32; the bf16 cast rides
    # a free VPU slot instead of being a separate XLA pass over x.
    h = x_ref[...].astype(jnp.bfloat16)
    for i in range(n_layers):                                  # unrolled at trace time
        w = wb[2 * i][...]                                     # bf16
        b = wb[2 * i + 1][...]                                 # f32 (1, Dout)
        acc = jnp.dot(h, w, preferred_element_type=jnp.float32) + b
        if i < n_layers - 1:
            acc = jnp.maximum(acc, 0.0)                        # ReLU in f32
            h = acc.astype(jnp.bfloat16)                       # bf16 for next MXU dot
        else:
            o_ref[...] = acc.astype(o_ref.dtype)               # single lane-dense store


# ----------------------------------------------------------------------------
# Wrapper: M-tiled, weights resident (single-buffered) across grid steps
# ----------------------------------------------------------------------------
def mlp_forward(x, layers):
    """x: (B, embed_size) f32.  layers: tuple of (weight, bias) per Linear."""
    b, e = x.shape
    c = layers[-1][0].shape[1]

    # ---- M tile choice: big tiles, minimal padding, >=2 grid steps when possible.
    if b <= 16:
        tm = _round_up(max(b, 8), 8)
    else:
        n_tiles = max(2, pl.cdiv(b, 1024))          # cap tile at ~1024 rows
        tm = _round_up(pl.cdiv(b, n_tiles), 16)     # 16 = bf16 sublane packing
    pb = _round_up(b, tm)
    grid = pb // tm

    xp = x if pb == b else jnp.pad(x, ((0, pb - b), (0, 0)))   # f32 pad only (cheap/rare)

    # ---- Lane-dense padding of every layer's out-dim to a multiple of 128.
    # Zero-padded columns/rows leave the real outputs bit-identical.
    padded_layers = []
    prev_pad = 0
    for (w, bias) in layers:
        w = w.astype(jnp.bfloat16)
        if bias.ndim == 1:
            bias = bias.reshape(1, -1)
        bias = bias.astype(jnp.float32)
        dout = w.shape[1]
        dout_p = _round_up(dout, 128)
        if prev_pad:
            w = jnp.pad(w, ((0, prev_pad), (0, 0)))
        if dout_p != dout:
            w = jnp.pad(w, ((0, 0), (0, dout_p - dout)))
            bias = jnp.pad(bias, ((0, 0), (0, dout_p - dout)))
        padded_layers.append((w, bias))
        prev_pad = dout_p - dout
    c_pad = padded_layers[-1][0].shape[1]

    # ---- Specs: x/out tiled over M (double-buffered); weights resident, single-buffered.
    in_specs = [pl.BlockSpec((tm, e), lambda i: (i, 0))]
    flat_args = [xp]
    w_bytes = 0
    for (w, bias) in padded_layers:
        in_specs.append(pl.BlockSpec(w.shape, lambda i: (0, 0),
                                     pipeline_mode=pl.Buffered(1)))
        in_specs.append(pl.BlockSpec(bias.shape, lambda i: (0, 0),
                                     pipeline_mode=pl.Buffered(1)))
        flat_args.extend([w, bias])
        w_bytes += w.size * w.dtype.itemsize + bias.size * bias.dtype.itemsize

    # ---- Explicit VMEM budget (default scoped limit is only 16/32 MiB).
    max_d = max([e] + [w.shape[1] for (w, _) in padded_layers])
    need = (2 * tm * e * 4            # x tile, double-buffered, f32
            + 2 * tm * c_pad * 4      # out tile, double-buffered, f32
            + w_bytes                 # resident weights/bias, single-buffered
            + 4 * tm * max_d * 4)     # in-kernel temporaries, slack
    try:
        phys = pltpu.get_tpu_info().vmem_capacity_bytes
    except Exception:
        phys = 128 * 1024 * 1024
    vmem_cap = min(int(phys * 0.75), 100 * 1024 * 1024)
    vmem_limit = int(min(max(int(need * 1.5), 32 * 1024 * 1024), vmem_cap))

    out = pl.pallas_call(
        _mlp_kernel,
        out_shape=jax.ShapeDtypeStruct((pb, c_pad), jnp.float32),
        grid=(grid,),
        in_specs=in_specs,
        out_specs=pl.BlockSpec((tm, c_pad), lambda i: (i, 0)),
        compiler_params=pltpu.CompilerParams(
            dimension_semantics=("parallel",),
            vmem_limit_bytes=vmem_limit),
    )(*flat_args)
    return out[:b, :c]


# ----------------------------------------------------------------------------
# Parameter construction
# ----------------------------------------------------------------------------
def init_params(key, embed_size, hidden_sizes, num_classes):
    # TODO(synk): MultiLayerPerceptron internals (depth / activation / dropout
    # defaults from mlp_kwargs) are not specified in the reference; assuming
    # Linear->ReLU hidden layers + final Linear, no dropout at inference.
    dims = (embed_size,) + tuple(hidden_sizes) + (num_classes,)
    keys = jax.random.split(key, len(dims) - 1)
    layers = []
    for k, din, dout in zip(keys, dims[:-1], dims[1:]):
        w = (jax.random.normal(k, (din, dout), jnp.float32)
             * (1.0 / float(din) ** 0.5)).astype(jnp.bfloat16)
        bias = jnp.linspace(-0.05, 0.05, dout, dtype=jnp.float32).reshape(1, dout)
        layers.append((w, bias))
    return tuple(layers)


if __name__ == "__main__":
    key = jax.random.PRNGKey(0)
    kx, kp = jax.random.split(key)

    B, E, H, C = 16, 64, 128, 8                  # (batch, embed_size, hidden, classes)
    x = jax.random.normal(kx, (B, E), jnp.float32)
    params = init_params(kp, embed_size=E, hidden_sizes=(H, H), num_classes=C)

    fwd = jax.jit(mlp_forward)
    out = fwd(x, params)
    jax.block_until_ready(out)

    assert out.shape == (B, C), out.shape
    assert bool(jnp.all(jnp.isfinite(out)))

    # Cross-check against a plain-JAX reference (bf16 weights, f32 accumulate).
    ref = x.astype(jnp.bfloat16)
    for i, (w, bias) in enumerate(params):
        ref = jnp.dot(ref, w, preferred_element_type=jnp.float32) + bias
        if i < len(params) - 1:
            ref = jnp.maximum(ref, 0.0).astype(jnp.bfloat16)
    assert jnp.allclose(out, ref, atol=2e-2, rtol=2e-2)

    print("KERNEL_OK")
</pallas_src>

<mosaic_0001>
module attributes {stable_mosaic.version = 11 : i64} {
  func.func @_mlp_kernel(%arg0: i32, %arg1: memref<16x64xf32, #tpu.memory_space<vmem>>, %arg2: memref<64x128xbf16, #tpu.memory_space<vmem>>, %arg3: memref<1x128xf32, #tpu.memory_space<vmem>>, %arg4: memref<128x128xbf16, #tpu.memory_space<vmem>>, %arg5: memref<1x128xf32, #tpu.memory_space<vmem>>, %arg6: memref<128x128xbf16, #tpu.memory_space<vmem>>, %arg7: memref<1x128xf32, #tpu.memory_space<vmem>>, %arg8: memref<16x128xf32, #tpu.memory_space<vmem>>) attributes {dimension_semantics = [#tpu.dimension_semantics<parallel>], iteration_bounds = array<i64: 1>, scalar_prefetch = 0 : i64, scratch_operands = 0 : i64, tpu.core_type = #tpu.core_type<tc>, window_params = [{transform_indices = @transform_0, window_bounds = array<i64: 16, 64>}, {pipeline_mode = #tpu.pipeline_mode<synchronous>, transform_indices = @transform_1, window_bounds = array<i64: 64, 128>}, {pipeline_mode = #tpu.pipeline_mode<synchronous>, transform_indices = @transform_2, window_bounds = array<i64: 1, 128>}, {pipeline_mode = #tpu.pipeline_mode<synchronous>, transform_indices = @transform_3, window_bounds = array<i64: 128, 128>}, {pipeline_mode = #tpu.pipeline_mode<synchronous>, transform_indices = @transform_4, window_bounds = array<i64: 1, 128>}, {pipeline_mode = #tpu.pipeline_mode<synchronous>, transform_indices = @transform_5, window_bounds = array<i64: 128, 128>}, {pipeline_mode = #tpu.pipeline_mode<synchronous>, transform_indices = @transform_6, window_bounds = array<i64: 1, 128>}, {transform_indices = @transform_7, window_bounds = array<i64: 16, 128>}]} {
    %c0 = arith.constant 0 : index
    %c0_0 = arith.constant 0 : index
    %0 = vector.load %arg1[%c0, %c0_0] : memref<16x64xf32, #tpu.memory_space<vmem>>, vector<16x64xf32>
    %1 = arith.truncf %0 : vector<16x64xf32> to vector<16x64xbf16>
    %c0_1 = arith.constant 0 : index
    %c0_2 = arith.constant 0 : index
    %2 = vector.load %arg2[%c0_1, %c0_2] : memref<64x128xbf16, #tpu.memory_space<vmem>>, vector<64x128xbf16>
    %c0_3 = arith.constant 0 : index
    %c0_4 = arith.constant 0 : index
    %3 = vector.load %arg3[%c0_3, %c0_4] : memref<1x128xf32, #tpu.memory_space<vmem>>, vector<1x128xf32>
    %cst = arith.constant dense<0.000000e+00> : vector<16x128xf32>
    %4 = tpu.matmul %1, %2, %cst {dimension_numbers = #tpu.dot_dimension_numbers<[1], [0], [0], [1], [0, 0, 1, 1], [], []>} : vector<16x64xbf16>, vector<64x128xbf16>, vector<16x128xf32> -> vector<16x128xf32>
    %5 = vector.broadcast %3 : vector<1x128xf32> to vector<16x128xf32>
    %6 = arith.addf %4, %5 : vector<16x128xf32>
    %cst_5 = arith.constant 0.000000e+00 : f32
    %7 = vector.broadcast %cst_5 : f32 to vector<16x128xf32>
    %8 = arith.maximumf %6, %7 : vector<16x128xf32>
    %9 = arith.truncf %8 : vector<16x128xf32> to vector<16x128xbf16>
    %c0_6 = arith.constant 0 : index
    %c0_7 = arith.constant 0 : index
    %10 = vector.load %arg4[%c0_6, %c0_7] : memref<128x128xbf16, #tpu.memory_space<vmem>>, vector<128x128xbf16>
    %c0_8 = arith.constant 0 : index
    %c0_9 = arith.constant 0 : index
    %11 = vector.load %arg5[%c0_8, %c0_9] : memref<1x128xf32, #tpu.memory_space<vmem>>, vector<1x128xf32>
    %cst_10 = arith.constant dense<0.000000e+00> : vector<16x128xf32>
    %12 = tpu.matmul %9, %10, %cst_10 {dimension_numbers = #tpu.dot_dimension_numbers<[1], [0], [0], [1], [0, 0, 1, 1], [], []>} : vector<16x128xbf16>, vector<128x128xbf16>, vector<16x128xf32> -> vector<16x128xf32>
    %13 = vector.broadcast %11 : vector<1x128xf32> to vector<16x128xf32>
    %14 = arith.addf %12, %13 : vector<16x128xf32>
    %cst_11 = arith.constant 0.000000e+00 : f32
    %15 = vector.broadcast %cst_11 : f32 to vector<16x128xf32>
    %16 = arith.maximumf %14, %15 : vector<16x128xf32>
    %17 = arith.truncf %16 : vector<16x128xf32> to vector<16x128xbf16>
    %c0_12 = arith.constant 0 : index
    %c0_13 = arith.constant 0 : index
    %18 = vector.load %arg6[%c0_12, %c0_13] : memref<128x128xbf16, #tpu.memory_space<vmem>>, vector<128x128xbf16>
    %c0_14 = arith.constant 0 : index
    %c0_15 = arith.constant 0 : index
    %19 = vector.load %arg7[%c0_14, %c0_15] : memref<1x128xf32, #tpu.memory_space<vmem>>, vector<1x128xf32>
    %cst_16 = arith.constant dense<0.000000e+00> : vector<16x128xf32>
    %20 = tpu.matmul %17, %18, %cst_16 {dimension_numbers = #tpu.dot_dimension_numbers<[1], [0], [0], [1], [0, 0, 1, 1], [], []>} : vector<16x128xbf16>, vector<128x128xbf16>, vector<16x128xf32> -> vector<16x128xf32>
    %21 = vector.broadcast %19 : vector<1x128xf32> to vector<16x128xf32>
    %22 = arith.addf %20, %21 : vector<16x128xf32>
    %c0_17 = arith.constant 0 : index
    %c0_18 = arith.constant 0 : index
    %23 = vector.load %arg8[%c0_17, %c0_18] : memref<16x128xf32, #tpu.memory_space<vmem>>, vector<16x128xf32>
    tpu.vector_store %arg8[%c0_17, %c0_18], %22 {strides = array<i32>} : memref<16x128xf32, #tpu.memory_space<vmem>>, vector<16x128xf32>,
    return
  }
  func.func @transform_0(%arg0: i32) -> (i32, i32) {
    %c0_i32 = arith.constant 0 : i32
    %c0_i32_0 = arith.constant 0 : i32
    return %arg0, %c0_i32 : i32, i32
  }
  func.func @transform_1(%arg0: i32) -> (i32, i32) {
    %c0_i32 = arith.constant 0 : i32
    %c0_i32_0 = arith.constant 0 : i32
    %c0_i32_1 = arith.constant 0 : i32
    return %c0_i32, %c0_i32_0 : i32, i32
  }
  func.func @transform_2(%arg0: i32) -> (i32, i32) {
    %c0_i32 = arith.constant 0 : i32
    %c0_i32_0 = arith.constant 0 : i32
    %c0_i32_1 = arith.constant 0 : i32
    return %c0_i32, %c0_i32_0 : i32, i32
  }
  func.func @transform_3(%arg0: i32) -> (i32, i32) {
    %c0_i32 = arith.constant 0 : i32
    %c0_i32_0 = arith.constant 0 : i32
    %c0_i32_1 = arith.constant 0 : i32
    return %c0_i32, %c0_i32_0 : i32, i32
  }
  func.func @transform_4(%arg0: i32) -> (i32, i32) {
    %c0_i32 = arith.constant 0 : i32
    %c0_i32_0 = arith.constant 0 : i32
    %c0_i32_1 = arith.constant 0 : i32
    return %c0_i32, %c0_i32_0 : i32, i32
  }
  func.func @transform_5(%arg0: i32) -> (i32, i32) {
    %c0_i32 = arith.constant 0 : i32
    %c0_i32_0 = arith.constant 0 : i32
    %c0_i32_1 = arith.constant 0 : i32
    return %c0_i32, %c0_i32_0 : i32, i32
  }
  func.func @transform_6(%arg0: i32) -> (i32, i32) {
    %c0_i32 = arith.constant 0 : i32
    %c0_i32_0 = arith.constant 0 : i32
    %c0_i32_1 = arith.constant 0 : i32
    return %c0_i32, %c0_i32_0 : i32, i32
  }
  func.func @transform_7(%arg0: i32) -> (i32, i32) {
    %c0_i32 = arith.constant 0 : i32
    %c0_i32_0 = arith.constant 0 : i32
    return %arg0, %c0_i32 : i32, i32
  }
}

</mosaic_0001>

<llo_original>
// kernel: mlp_forward.1
$region0: #{mlp_forward.1}
  #allocation0 [shape = 'u32[]', space=smem, size = 0x4, offset = 0x4, fixed_abs, tag = 'smem constant byte address 0x4 - core index']
  #allocation1 [shape = 'u32[144,128]{1,0:T(1,128)}', space=vmem, size = 0x12000, scoped, tag = 'internal scratch']
  %s0 = inlined_call_operand.vmem [shape: f32[16,64], index: 0, kind: input, shape index: {}]
  %s1 = inlined_call_operand.vmem [shape: bf16[64,128], index: 1, kind: input, shape index: {}]
  %s2 = inlined_call_operand.vmem [shape: f32[1,128], index: 2, kind: input, shape index: {}]
  %s3 = inlined_call_operand.vmem [shape: bf16[128,128], index: 3, kind: input, shape index: {}]
  %s4 = inlined_call_operand.vmem [shape: f32[1,128], index: 4, kind: input, shape index: {}]
  %s5 = inlined_call_operand.vmem [shape: bf16[128,128], index: 5, kind: input, shape index: {}]
  %s6 = inlined_call_operand.vmem [shape: f32[1,128], index: 6, kind: input, shape index: {}]
  %s7 = inlined_call_operand.vmem [shape: f32[16,128], index: 7, kind: output, shape index: {}]
  %s8 = sld [smem:[#allocation0]]
  $region38: #{mlp_forward.1} parent=0
    _
  %s10 = ssub.s32 1, %s8
  %s11 = scalar_select 0, %s10, %s8
  // Predicated region
  $region2: #{mlp_forward.1} parent=0 // pred_check
    _
  $region3: #{mlp_forward.1} parent=0 // pred_check_branch
    %13 = sbr.rel (0) target = $region5
  $region4: #{mlp_forward.1} parent=0 // pred_region
    _
  $region5: #{mlp_forward.1} parent=0 // pred_fallthru
    _
  // Predicated region
  $region6: #{mlp_forward.1} parent=0 // pred_check
    _
  $region7: #{mlp_forward.1} parent=0 // pred_check_branch
    %15 = sbr.rel (0) target = $region9
  $region8: #{mlp_forward.1} parent=0 // pred_region
    _
  $region9: #{mlp_forward.1} parent=0 // pred_fallthru
    _
  // Predicated region
  $region10: #{mlp_forward.1} parent=0 // pred_check
    _
  $region11: #{mlp_forward.1} parent=0 // pred_check_branch
    %17 = sbr.rel (0) target = $region13
  $region12: #{mlp_forward.1} parent=0 // pred_region
    _
  $region13: #{mlp_forward.1} parent=0 // pred_fallthru
    _
  // Predicated region
  $region14: #{mlp_forward.1} parent=0 // pred_check
    _
  $region15: #{mlp_forward.1} parent=0 // pred_check_branch
    %19 = sbr.rel (0) target = $region17
  $region16: #{mlp_forward.1} parent=0 // pred_region
    _
  $region17: #{mlp_forward.1} parent=0 // pred_fallthru
    _
  // Predicated region
  $region18: #{mlp_forward.1} parent=0 // pred_check
    _
  $region19: #{mlp_forward.1} parent=0 // pred_check_branch
    %21 = sbr.rel (0) target = $region21
  $region20: #{mlp_forward.1} parent=0 // pred_region
    _
  $region21: #{mlp_forward.1} parent=0 // pred_fallthru
    _
  // Predicated region
  $region22: #{mlp_forward.1} parent=0 // pred_check
    _
  $region23: #{mlp_forward.1} parent=0 // pred_check_branch
    %23 = sbr.rel (0) target = $region25
  $region24: #{mlp_forward.1} parent=0 // pred_region
    _
  $region25: #{mlp_forward.1} parent=0 // pred_fallthru
    _
  // Predicated region
  $region26: #{mlp_forward.1} parent=0 // pred_check
    _
  $region27: #{mlp_forward.1} parent=0 // pred_check_branch
    %25 = sbr.rel (0) target = $region29
  $region28: #{mlp_forward.1} parent=0 // pred_region
    _
  $region29: #{mlp_forward.1} parent=0 // pred_fallthru
    _
  %v27 = vld [vmem:[%s0] sm:$0xff]
  %v28 = vld [vmem:[%s0 + $0x8] sm:$0xff]
  %v29 = vpack.c.bf16 %v28, %v27
  %v30 = vld [vmem:[%s1] sm:$0xf]
  %v31 = vld [vmem:[%s1 + $0x4] sm:$0xf]
  %v32 = vld [vmem:[%s1 + $0x8] sm:$0xf]
  %v33 = vld [vmem:[%s1 + $0xc] sm:$0xf]
  %v34 = vld [vmem:[%s1 + $0x10] sm:$0xf]
  %v35 = vld [vmem:[%s1 + $0x14] sm:$0xf]
  %v36 = vld [vmem:[%s1 + $0x18] sm:$0xf]
  %v37 = vld [vmem:[%s1 + $0x1c] sm:$0xf]
  %v38 = vld [vmem:[%s2] sm:$0x1]
  %v40 = vlaneseq
  %v41 = vshrl.u32 %v40, 7
  %v42 = vsub.s32 0, %v41
  %v43 = vrot.slane %v38, %v42
  %v53 = vunpack.c.l.b16 %v30
  %v54 = vunpack.c.l.b16 %v31
  %v55 = vunpack.c.l.b16 %v32
  %v56 = vunpack.c.l.b16 %v33
  %v57 = vunpack.c.l.b16 %v34
  %v58 = vunpack.c.l.b16 %v35
  %v59 = vunpack.c.l.b16 %v36
  %v60 = vunpack.c.l.b16 %v37
  %v61 = vpack.c.b16 %v54, %v53
  %v62 = vpack.c.b16 %v56, %v55
  %v63 = vpack.c.b16 %v58, %v57
  %v64 = vpack.c.b16 %v60, %v59
  %vm69 = vcmask 523264
  %v71 = vsel %vm69, %v29, 0
  %73 = vmatprep.subr.bf16.mxu0 0
  %74 = vmatpush1.bf16.msra.mxu0 %v61
  %75 = vmatprep.subr.bf16.mxu0 0
  %76 = vmatpush1.bf16.msra.mxu0 %v62
  %77 = vmatprep.subr.bf16.mxu0 0
  %78 = vmatpush1.bf16.msra.mxu0 %v63
  %79 = vmatprep.subr.bf16.mxu0 0
  %80 = vmatpush1.bf16.msra.mxu0 %v64
  %81 = vmatprep.subr.bf16.mxu0 0
  %82 = vmatpush1.bf16.msra.mxu0 0
  %83 = vmatprep.subr.bf16.mxu0 0
  %84 = vmatpush1.bf16.msra.mxu0 0
  %85 = vmatprep.subr.bf16.mxu0 0
  %86 = vmatpush1.bf16.msra.mxu0 0
  %87 = vmatprep.subr.bf16.mxu0 0
  %88 = vmatpush1.bf16.msra.mxu0 0
  %89 = vmatprep.subr.bf16.mxu0 0
  %90 = vmatpush1.bf16.msra.mxu0 0
  %91 = vmatprep.subr.bf16.mxu0 0
  %92 = vmatpush1.bf16.msra.mxu0 0
  %93 = vmatprep.subr.bf16.mxu0 0
  %94 = vmatpush1.bf16.msra.mxu0 0
  %95 = vmatprep.subr.bf16.mxu0 0
  %96 = vmatpush1.bf16.msra.mxu0 0
  %97 = vmatprep.subr.bf16.mxu0 0
  %98 = vmatpush1.bf16.msra.mxu0 0
  %99 = vmatprep.subr.bf16.mxu0 0
  %100 = vmatpush1.bf16.msra.mxu0 0
  %101 = vmatprep.subr.bf16.mxu0 0
  %102 = vmatpush1.bf16.msra.mxu0 0
  %103 = vmatprep.subr.bf16.mxu0 0
  %104 = vmatpush1.bf16.msra.mxu0 0
  %105 = vmatprep.mubr.bf16.mxu0 0
  %106 = vmatmul.mubr.bf16.gmra.mrb[0].mxu0 %v71
  %v107 = vpop.f32.mrb[0].mxu0
  %v108 = vadd.f32 %v43, %v107
  %v109 = vpop.f32.mrb[0].mxu0
  %v110 = vpop.f32.mrb[0].mxu0
  %v111 = vadd.f32 %v43, %v110
  %v112 = vpop.f32.mrb[0].mxu0
  %113 = vdwg.mxu0
  %v114 = vmax.f32 %v108, 0.0
  %v115 = vmax.f32 %v111, 0.0
  %v116 = vpack.c.bf16 %v115, %v114
  %v117 = vld [vmem:[%s3] sm:$0xf]
  %v118 = vld [vmem:[%s3 + $0x4] sm:$0xf]
  %v119 = vld [vmem:[%s3 + $0x8] sm:$0xf]
  %v120 = vld [vmem:[%s3 + $0xc] sm:$0xf]
  %v121 = vld [vmem:[%s3 + $0x10] sm:$0xf]
  %v122 = vld [vmem:[%s3 + $0x14] sm:$0xf]
  %v123 = vld [vmem:[%s3 + $0x18] sm:$0xf]
  %v124 = vld [vmem:[%s3 + $0x1c] sm:$0xf]
  %v125 = vld [vmem:[%s3 + $0x20] sm:$0xf]
  %v126 = vld [vmem:[%s3 + $0x24] sm:$0xf]
  %v127 = vld [vmem:[%s3 + $0x28] sm:$0xf]
  %v128 = vld [vmem:[%s3 + $0x2c] sm:$0xf]
  %v129 = vld [vmem:[%s3 + $0x30] sm:$0xf]
  %v130 = vld [vmem:[%s3 + $0x34] sm:$0xf]
  %v131 = vld [vmem:[%s3 + $0x38] sm:$0xf]
  %v132 = vld [vmem:[%s3 + $0x3c] sm:$0xf]
  %v133 = vld [vmem:[%s4] sm:$0x1]
  %v135 = vlaneseq
  %v136 = vshrl.u32 %v135, 7
  %v137 = vsub.s32 0, %v136
  %v138 = vrot.slane %v133, %v137
  %v156 = vunpack.c.l.b16 %v117
  %v157 = vunpack.c.l.b16 %v118
  %v158 = vunpack.c.l.b16 %v119
  %v159 = vunpack.c.l.b16 %v120
  %v160 = vunpack.c.l.b16 %v121
  %v161 = vunpack.c.l.b16 %v122
  %v162 = vunpack.c.l.b16 %v123
  %v163 = vunpack.c.l.b16 %v124
  %v164 = vunpack.c.l.b16 %v125
  %v165 = vunpack.c.l.b16 %v126
  %v166 = vunpack.c.l.b16 %v127
  %v167 = vunpack.c.l.b16 %v128
  %v168 = vunpack.c.l.b16 %v129
  %v169 = vunpack.c.l.b16 %v130
  %v170 = vunpack.c.l.b16 %v131
  %v171 = vunpack.c.l.b16 %v132
  %v172 = vpack.c.b16 %v157, %v156
  %v173 = vpack.c.b16 %v159, %v158
  %v174 = vpack.c.b16 %v161, %v160
  %v175 = vpack.c.b16 %v163, %v162
  %v176 = vpack.c.b16 %v165, %v164
  %v177 = vpack.c.b16 %v167, %v166
  %v178 = vpack.c.b16 %v169, %v168
  %v179 = vpack.c.b16 %v171, %v170
  %188 = vmatprep.subr.bf16.mxu0 0
  %189 = vmatpush1.bf16.msra.mxu0 %v172
  %190 = vmatprep.subr.bf16.mxu0 0
  %191 = vmatpush1.bf16.msra.mxu0 %v173
  %192 = vmatprep.subr.bf16.mxu0 0
  %193 = vmatpush1.bf16.msra.mxu0 %v174
  %194 = vmatprep.subr.bf16.mxu0 0
  %195 = vmatpush1.bf16.msra.mxu0 %v175
  %196 = vmatprep.subr.bf16.mxu0 0
  %197 = vmatpush1.bf16.msra.mxu0 %v176
  %198 = vmatprep.subr.bf16.mxu0 0
  %199 = vmatpush1.bf16.msra.mxu0 %v177
  %200 = vmatprep.subr.bf16.mxu0 0
  %201 = vmatpush1.bf16.msra.mxu0 %v178
  %202 = vmatprep.subr.bf16.mxu0 0
  %203 = vmatpush1.bf16.msra.mxu0 %v179
  %204 = vmatprep.subr.bf16.mxu0 0
  %205 = vmatpush1.bf16.msra.mxu0 0
  %206 = vmatprep.subr.bf16.mxu0 0
  %207 = vmatpush1.bf16.msra.mxu0 0
  %208 = vmatprep.subr.bf16.mxu0 0
  %209 = vmatpush1.bf16.msra.mxu0 0
  %210 = vmatprep.subr.bf16.mxu0 0
  %211 = vmatpush1.bf16.msra.mxu0 0
  %212 = vmatprep.subr.bf16.mxu0 0
  %213 = vmatpush1.bf16.msra.mxu0 0
  %214 = vmatprep.subr.bf16.mxu0 0
  %215 = vmatpush1.bf16.msra.mxu0 0
  %216 = vmatprep.subr.bf16.mxu0 0
  %217 = vmatpush1.bf16.msra.mxu0 0
  %218 = vmatprep.subr.bf16.mxu0 0
  %219 = vmatpush1.bf16.msra.mxu0 0
  %220 = vmatprep.mubr.bf16.mxu0 0
  %221 = vmatmul.mubr.bf16.gmra.mrb[0].mxu0 %v116
  %v222 = vpop.f32.mrb[0].mxu0
  %v223 = vadd.f32 %v138, %v222
  %v224 = vpop.f32.mrb[0].mxu0
  %v225 = vpop.f32.mrb[0].mxu0
  %v226 = vadd.f32 %v138, %v225
  %v227 = vpop.f32.mrb[0].mxu0
  %228 = vdwg.mxu0
  %v229 = vmax.f32 %v223, 0.0
  %v230 = vmax.f32 %v226, 0.0
  %v231 = vpack.c.bf16 %v230, %v229
  %v232 = vld [vmem:[%s5] sm:$0xf]
  %v233 = vld [vmem:[%s5 + $0x4] sm:$0xf]
  %v234 = vld [vmem:[%s5 + $0x8] sm:$0xf]
  %v235 = vld [vmem:[%s5 + $0xc] sm:$0xf]
  %v236 = vld [vmem:[%s5 + $0x10] sm:$0xf]
  %v237 = vld [vmem:[%s5 + $0x14] sm:$0xf]
  %v238 = vld [vmem:[%s5 + $0x18] sm:$0xf]
  %v239 = vld [vmem:[%s5 + $0x1c] sm:$0xf]
  %v240 = vld [vmem:[%s5 + $0x20] sm:$0xf]
  %v241 = vld [vmem:[%s5 + $0x24] sm:$0xf]
  %v242 = vld [vmem:[%s5 + $0x28] sm:$0xf]
  %v243 = vld [vmem:[%s5 + $0x2c] sm:$0xf]
  %v244 = vld [vmem:[%s5 + $0x30] sm:$0xf]
  %v245 = vld [vmem:[%s5 + $0x34] sm:$0xf]
  %v246 = vld [vmem:[%s5 + $0x38] sm:$0xf]
  %v247 = vld [vmem:[%s5 + $0x3c] sm:$0xf]
  %v248 = vld [vmem:[%s6] sm:$0x1]
  %v250 = vlaneseq
  %v251 = vshrl.u32 %v250, 7
  %v252 = vsub.s32 0, %v251
  %v253 = vrot.slane %v248, %v252
  %v271 = vunpack.c.l.b16 %v232
  %v272 = vunpack.c.l.b16 %v233
  %v273 = vunpack.c.l.b16 %v234
  %v274 = vunpack.c.l.b16 %v235
  %v275 = vunpack.c.l.b16 %v236
  %v276 = vunpack.c.l.b16 %v237
  %v277 = vunpack.c.l.b16 %v238
  %v278 = vunpack.c.l.b16 %v239
  %v279 = vunpack.c.l.b16 %v240
  %v280 = vunpack.c.l.b16 %v241
  %v281 = vunpack.c.l.b16 %v242
  %v282 = vunpack.c.l.b16 %v243
  %v283 = vunpack.c.l.b16 %v244
  %v284 = vunpack.c.l.b16 %v245
  %v285 = vunpack.c.l.b16 %v246
  %v286 = vunpack.c.l.b16 %v247
  %v287 = vpack.c.b16 %v272, %v271
  %v288 = vpack.c.b16 %v274, %v273
  %v289 = vpack.c.b16 %v276, %v275
  %v290 = vpack.c.b16 %v278, %v277
  %v291 = vpack.c.b16 %v280, %v279
  %v292 = vpack.c.b16 %v282, %v281
  %v293 = vpack.c.b16 %v284, %v283
  %v294 = vpack.c.b16 %v286, %v285
  %303 = vmatprep.subr.bf16.mxu0 0
  %304 = vmatpush1.bf16.msra.mxu0 %v287
  %305 = vmatprep.subr.bf16.mxu0 0
  %306 = vmatpush1.bf16.msra.mxu0 %v288
  %307 = vmatprep.subr.bf16.mxu0 0
  %308 = vmatpush1.bf16.msra.mxu0 %v289
  %309 = vmatprep.subr.bf16.mxu0 0
  %310 = vmatpush1.bf16.msra.mxu0 %v290
  %311 = vmatprep.subr.bf16.mxu0 0
  %312 = vmatpush1.bf16.msra.mxu0 %v291
  %313 = vmatprep.subr.bf16.mxu0 0
  %314 = vmatpush1.bf16.msra.mxu0 %v292
  %315 = vmatprep.subr.bf16.mxu0 0
  %316 = vmatpush1.bf16.msra.mxu0 %v293
  %317 = vmatprep.subr.bf16.mxu0 0
  %318 = vmatpush1.bf16.msra.mxu0 %v294
  %319 = vmatprep.subr.bf16.mxu0 0
  %320 = vmatpush1.bf16.msra.mxu0 0
  %321 = vmatprep.subr.bf16.mxu0 0
  %322 = vmatpush1.bf16.msra.mxu0 0
  %323 = vmatprep.subr.bf16.mxu0 0
  %324 = vmatpush1.bf16.msra.mxu0 0
  %325 = vmatprep.subr.bf16.mxu0 0
  %326 = vmatpush1.bf16.msra.mxu0 0
  %327 = vmatprep.subr.bf16.mxu0 0
  %328 = vmatpush1.bf16.msra.mxu0 0
  %329 = vmatprep.subr.bf16.mxu0 0
  %330 = vmatpush1.bf16.msra.mxu0 0
  %331 = vmatprep.subr.bf16.mxu0 0
  %332 = vmatpush1.bf16.msra.mxu0 0
  %333 = vmatprep.subr.bf16.mxu0 0
  %334 = vmatpush1.bf16.msra.mxu0 0
  %335 = vmatprep.mubr.bf16.mxu0 0
  %336 = vmatmul.mubr.bf16.gmra.mrb[0].mxu0 %v231
  %v337 = vpop.f32.mrb[0].mxu0
  %v338 = vadd.f32 %v253, %v337
  %v339 = vpop.f32.mrb[0].mxu0
  %v340 = vpop.f32.mrb[0].mxu0
  %v341 = vadd.f32 %v253, %v340
  %v342 = vpop.f32.mrb[0].mxu0
  %343 = vdwg.mxu0
  %344 = vst [vmem:[%s7] sm:$0xff] %v338
  %345 = vst [vmem:[%s7 + $0x8] sm:$0xff] %v341
  // Predicated region
  $region30: #{mlp_forward.1} parent=0 // pred_check
    _
  $region31: #{mlp_forward.1} parent=0 // pred_check_branch
    %347 = sbr.rel (0) target = $region33
  $region32: #{mlp_forward.1} parent=0 // pred_region
    _
  $region33: #{mlp_forward.1} parent=0 // pred_fallthru
    _
  // Predicated region
  $region34: #{mlp_forward.1} parent=0 // pred_check
    _
  $region35: #{mlp_forward.1} parent=0 // pred_check_branch
    %349 = sbr.rel (0) target = $region37
  $region36: #{mlp_forward.1} parent=0 // pred_region
    _
  $region37: #{mlp_forward.1} parent=0 // pred_fallthru
    _

</llo_original>
